<compile_context>
chip_gen: v7x
topology: tpu7x:2x2x1
jax: 0.10.0
libtpu: 0.0.40
codegen_flags: <defaults>
</compile_context>

<pallas_src>
import jax
import jax.numpy as jnp
from jax.experimental import pallas as pl
from jax.experimental.pallas import tpu as pltpu


_LANES = 128
_SUBLANES = 8
_VMEM_BUDGET = 24 << 20        # conservative; fits v7x's 32 MiB scoped default


def _hadamard_kernel(q_ref, s_ref, o_ref):
    # Pure elementwise multiply on VMEM tiles.  The support's leading-dim
    # permute is done by its BlockSpec index_map, so the body is rank-agnostic.
    o_ref[...] = q_ref[...] * s_ref[...]


def _round_down(x, m):
    return max(m, (x // m) * m)


def _fuse_lane_dense(query, support):
    """Fast path: C*H*W is a multiple of 128 -> lane-dense (rows, 128) slabs."""
    B, Ns, C, H, W = query.shape
    dtype = query.dtype
    L = C * H * W
    rows = L // _LANES

    # Contiguous (free) reshapes; no data movement.
    q = query.reshape(B, Ns, rows, _LANES)
    s = support.reshape(Ns, B, rows, _LANES)

    # 3 arrays (q, s, out) x double-buffered pipeline x (Ns, tr, 128) block.
    bytes_per_row = 3 * 2 * Ns * _LANES * dtype.itemsize
    cap = max(_SUBLANES, _VMEM_BUDGET // bytes_per_row)
    tr = min(rows, cap)
    if tr < rows:
        tr = _round_down(tr, _SUBLANES)   # sublane-aligned when not full extent
    grid = (B, pl.cdiv(rows, tr))

    out = pl.pallas_call(
        _hadamard_kernel,
        out_shape=jax.ShapeDtypeStruct((B, Ns, rows, _LANES), dtype),
        grid_spec=pltpu.PrefetchScalarGridSpec(
            num_scalar_prefetch=0,
            grid=grid,
            in_specs=[
                # query block: (1[squeezed], Ns, tr, 128) at (b, 0, r, 0)
                pl.BlockSpec((None, Ns, tr, _LANES),
                             lambda b, r: (b, 0, r, 0)),
                # support block: (Ns, 1[squeezed], tr, 128) at (0, b, r, 0)
                # -> the (Ns, B) -> (B, Ns) permute is fused into this map.
                pl.BlockSpec((Ns, None, tr, _LANES),
                             lambda b, r: (0, b, r, 0)),
            ],
            out_specs=pl.BlockSpec((None, Ns, tr, _LANES),
                                   lambda b, r: (b, 0, r, 0)),
        ),
        compiler_params=pltpu.CompilerParams(
            dimension_semantics=("parallel", "parallel"),
        ),
        cost_estimate=pl.CostEstimate(
            flops=B * Ns * L,
            transcendentals=0,
            bytes_accessed=3 * B * Ns * L * dtype.itemsize,
        ),
    )(q, s)
    return out.reshape(B, Ns, C, H, W)


def _fuse_general(query, support):
    """Fallback: arbitrary C/H/W.  Full H*W as the last (lane) dim, tile C."""
    B, Ns, C, H, W = query.shape
    dtype = query.dtype
    HW = H * W

    q = query.reshape(B, Ns, C, HW)
    s = support.reshape(Ns, B, C, HW)

    # Internal lane layout pads HW up to a multiple of 128; budget for that.
    hw_padded = pl.cdiv(HW, _LANES) * _LANES
    bytes_per_c = 3 * 2 * hw_padded * dtype.itemsize
    cap = max(_SUBLANES, _VMEM_BUDGET // bytes_per_c)
    tc = min(C, cap)
    if tc < C:
        tc = _round_down(tc, _SUBLANES)
    grid = (B, Ns, pl.cdiv(C, tc))

    out = pl.pallas_call(
        _hadamard_kernel,
        out_shape=jax.ShapeDtypeStruct((B, Ns, C, HW), dtype),
        grid_spec=pltpu.PrefetchScalarGridSpec(
            num_scalar_prefetch=0,
            grid=grid,
            in_specs=[
                pl.BlockSpec((None, None, tc, HW),
                             lambda b, n, c: (b, n, c, 0)),
                # permute fused into the index_map: support indexed (n, b).
                pl.BlockSpec((None, None, tc, HW),
                             lambda b, n, c: (n, b, c, 0)),
            ],
            out_specs=pl.BlockSpec((None, None, tc, HW),
                                   lambda b, n, c: (b, n, c, 0)),
        ),
        compiler_params=pltpu.CompilerParams(
            dimension_semantics=("parallel", "parallel", "parallel"),
        ),
        cost_estimate=pl.CostEstimate(
            flops=B * Ns * C * HW,
            transcendentals=0,
            bytes_accessed=3 * B * Ns * C * HW * dtype.itemsize,
        ),
    )(q, s)
    return out.reshape(B, Ns, C, H, W)


def hadamard_fuse(query, support):
    """out[b, n] = query[b, n] * support[n, b], all trailing dims elementwise.

    query:   (B, Ns, C, H, W)
    support: (Ns, B, C, H, W)
    returns: (B, Ns, C, H, W)
    """
    B, Ns, C, H, W = query.shape
    assert support.shape == (Ns, B, C, H, W), (
        f"Incompatible shapes query={query.shape} support={support.shape}")
    L = C * H * W
    if L % _LANES == 0:
        return _fuse_lane_dense(query, support)
    return _fuse_general(query, support)


class HADAMARDPallas:
    """JAX/Pallas port of the HADAMARD fusion module."""

    def __init__(self, cfg=None):
        self.cfg = cfg
        self.input_name = "_p2"
        self.output_name = "output_features"
        # TODO(synk): AAFIOMode enum / registry not available here; record the
        # IO modes as plain strings for attribute parity.
        self.in_mode = "Q_BNCHW_S_NBCHW"
        self.out_mode = "Q_BNCHW"
        self.channels = 256

    def apply_net(self, x, net, shape=None):
        """Base-class helper: flatten(end_dim=1) -> net -> reshape back."""
        if shape is None:
            shape = x.shape
        x = x.reshape((-1,) + x.shape[2:])
        x = net(x)
        return x.reshape(shape)

    def forward(self, features):
        query_features = features["query" + self.input_name]      # list, (B,Ns,C,H,W)
        support_features = features["support" + self.input_name]  # list, (Ns,B,C,H,W)
        support_targets = features["support_targets"]             # unused by HADAMARD
        del support_targets
        query_support_merged = []
        for query, support in zip(query_features, support_features):
            Ns, B, C, Hs, Ws = support.shape
            Bq, Nq, Cq, Hq, Wq = query.shape
            assert Hs == Hq and Ws == Wq, (
                f"Incompatible attention for this fusion module Hs={Hs!r} must "
                f"equal Hq={Hq!r} and Ws={Ws!r} = Wq={Wq!r}")
            query_support_merged.append(hadamard_fuse(query, support))
        features.update({self.output_name: query_support_merged})
        return features


if __name__ == "__main__":
    B, Ns, C = 2, 3, 256
    spatials = [(8, 8), (4, 4)]   # two small feature-pyramid levels

    key = jax.random.PRNGKey(0)
    keys = jax.random.split(key, 2 * len(spatials) + 2)
    query_feats, support_feats = [], []
    for i, (H, W) in enumerate(spatials):
        q = jax.random.normal(keys[2 * i], (B, Ns, C, H, W), jnp.float32)
        s = jax.random.normal(keys[2 * i + 1], (Ns, B, C, H, W), jnp.float32)
        query_feats.append(q)
        support_feats.append(s)

    module = HADAMARDPallas(cfg=None)
    features = {
        "query_p2": query_feats,
        "support_p2": support_feats,
        "support_targets": [],
    }

    out_feats = module.forward(features)[module.output_name]
    out_feats = jax.block_until_ready(out_feats)

    # Reference check: Hadamard product with support permuted (Ns,B,...) -> (B,Ns,...)
    for q, s, o in zip(query_feats, support_feats, out_feats):
        ref = q * jnp.transpose(s, (1, 0, 2, 3, 4))
        assert o.shape == q.shape
        assert jnp.allclose(o, ref, atol=1e-6, rtol=1e-6)

    # Also exercise the general (non lane-multiple) fallback path directly.
    qg = jax.random.normal(keys[-2], (B, Ns, 12, 5, 5), jnp.float32)   # L=300
    sg = jax.random.normal(keys[-1], (Ns, B, 12, 5, 5), jnp.float32)
    og = jax.block_until_ready(hadamard_fuse(qg, sg))
    refg = qg * jnp.transpose(sg, (1, 0, 2, 3, 4))
    assert jnp.allclose(og, refg, atol=1e-6, rtol=1e-6)

    print("KERNEL_OK")
</pallas_src>

<mosaic_0001>
module attributes {stable_mosaic.version = 11 : i64} {
  func.func @_hadamard_kernel(%arg0: i32, %arg1: i32, %arg2: memref<1x3x128x128xf32, #tpu.memory_space<vmem>>, %arg3: memref<3x1x128x128xf32, #tpu.memory_space<vmem>>, %arg4: memref<1x3x128x128xf32, #tpu.memory_space<vmem>>) attributes {dimension_semantics = [#tpu.dimension_semantics<parallel>, #tpu.dimension_semantics<parallel>], iteration_bounds = array<i64: 2, 1>, scalar_prefetch = 0 : i64, scratch_operands = 0 : i64, tpu.core_type = #tpu.core_type<tc>, window_params = [{transform_indices = @transform_0, window_bounds = array<i64: 1, 3, 128, 128>}, {transform_indices = @transform_1, window_bounds = array<i64: 3, 1, 128, 128>}, {transform_indices = @transform_2, window_bounds = array<i64: 1, 3, 128, 128>}]} {
    %c0 = arith.constant 0 : index
    %c0_0 = arith.constant 0 : index
    %c0_1 = arith.constant 0 : index
    %c0_2 = arith.constant 0 : index
    %0 = vector.load %arg2[%c0, %c0_0, %c0_1, %c0_2] : memref<1x3x128x128xf32, #tpu.memory_space<vmem>>, vector<1x3x128x128xf32>
    %1 = vector.shape_cast %0 : vector<1x3x128x128xf32> to vector<3x128x128xf32>
    %c0_3 = arith.constant 0 : index
    %c0_4 = arith.constant 0 : index
    %c0_5 = arith.constant 0 : index
    %c0_6 = arith.constant 0 : index
    %2 = vector.load %arg3[%c0_3, %c0_4, %c0_5, %c0_6] : memref<3x1x128x128xf32, #tpu.memory_space<vmem>>, vector<3x1x128x128xf32>
    %3 = vector.shape_cast %2 : vector<3x1x128x128xf32> to vector<3x128x128xf32>
    %4 = arith.mulf %1, %3 : vector<3x128x128xf32>
    %c0_7 = arith.constant 0 : index
    %c0_8 = arith.constant 0 : index
    %c0_9 = arith.constant 0 : index
    %c0_10 = arith.constant 0 : index
    %5 = vector.load %arg4[%c0_7, %c0_8, %c0_9, %c0_10] : memref<1x3x128x128xf32, #tpu.memory_space<vmem>>, vector<1x3x128x128xf32>
    %6 = vector.shape_cast %5 : vector<1x3x128x128xf32> to vector<3x128x128xf32>
    %7 = vector.shape_cast %4 : vector<3x128x128xf32> to vector<1x3x128x128xf32>
    tpu.vector_store %arg4[%c0_7, %c0_8, %c0_9, %c0_10], %7 {strides = array<i32>} : memref<1x3x128x128xf32, #tpu.memory_space<vmem>>, vector<1x3x128x128xf32>,
    return
  }
  func.func @transform_0(%arg0: i32, %arg1: i32) -> (i32, i32, i32, i32) {
    %c0_i32 = arith.constant 0 : i32
    %c0_i32_0 = arith.constant 0 : i32
    %c0_i32_1 = arith.constant 0 : i32
    return %arg0, %c0_i32, %arg1, %c0_i32_0 : i32, i32, i32, i32
  }
  func.func @transform_1(%arg0: i32, %arg1: i32) -> (i32, i32, i32, i32) {
    %c0_i32 = arith.constant 0 : i32
    %c0_i32_0 = arith.constant 0 : i32
    %c0_i32_1 = arith.constant 0 : i32
    return %c0_i32, %arg0, %arg1, %c0_i32_0 : i32, i32, i32, i32
  }
  func.func @transform_2(%arg0: i32, %arg1: i32) -> (i32, i32, i32, i32) {
    %c0_i32 = arith.constant 0 : i32
    %c0_i32_0 = arith.constant 0 : i32
    %c0_i32_1 = arith.constant 0 : i32
    return %arg0, %c0_i32, %arg1, %c0_i32_0 : i32, i32, i32, i32
  }
}

</mosaic_0001>

<llo_original>
// kernel: tpu_custom_call.1
$region0: #{tpu_custom_call.1}
  #allocation0 [shape = 'u32[]', space=smem, size = 0x4, offset = 0x4, fixed_abs, tag = 'smem constant byte address 0x4 - core index']
  #allocation1 [shape = 'u32[144,128]{1,0:T(1,128)}', space=vmem, size = 0x12000, scoped, tag = 'internal scratch']
  #allocation8 [shape = 's32[]', space=sflag, size = 0x4, offset = 0, fixed_abs, tag = 'sflag constant byte address 0x0 - dummy sync flag']
  %s0 = inlined_call_operand.hbm [shape: f32[2,3,128,128], index: 0, kind: input, shape index: {}]
  %s1 = inlined_call_operand.hbm [shape: f32[3,2,128,128], index: 1, kind: input, shape index: {}]
  %s2 = inlined_call_operand.hbm [shape: f32[2,3,128,128], index: 2, kind: output, shape index: {}]
  %s3 = sld [smem:[#allocation0]]
  $region49: #{tpu_custom_call.1} parent=0
    _
  %s5 = ssub.s32 1, %s3
  %s6 = scalar_select 0, %s5, %s3
  $region1: #{tpu_custom_call.1} parent=0
    #allocation2 [shape = 'u8[393216]{0}', space=vmem, size = 0x60000, scoped, tag = 'input window, operand 0']
    #allocation3 [shape = 's32[2]{0}', space=sflag, size = 0x8, scoped, tag = 'scoped memory for tpu_custom_call.1']
    #allocation4 [shape = 's32[2]{0}', space=sflag, size = 0x8, scoped, tag = 'scoped memory for tpu_custom_call.1']
    #allocation5 [shape = 'u8[393216]{0}', space=vmem, size = 0x60000, scoped, tag = 'input window, operand 1']
    #allocation6 [shape = 's32[2]{0}', space=sflag, size = 0x8, scoped, tag = 'scoped memory for tpu_custom_call.1']
    #allocation7 [shape = 'u8[393216]{0}', space=vmem, size = 0x60000, scoped, tag = 'output window, operand 0']
    %7 = vsyncpa [#allocation3], 0
    %s8 = scalar_lea.sflag [#allocation3], 1
    %9 = vsyncpa %s8, 0
    %10 = vsyncpa [#allocation6], 0
    %s11 = scalar_lea.sflag [#allocation6], 1
    %12 = vsyncpa %s11, 0
    %13 = vsyncpa [#allocation4], 0
    %s14 = scalar_lea.sflag [#allocation4], 1
    %15 = vsyncpa %s14, 0
    loop: start=0, step=1, limit=4
    $region2: #{tpu_custom_call.1} parent=1 // loop_pre_header
      _
    $region3: #{tpu_custom_call.1} parent=1 // loop_header
      %s17 = sphi 0, %s21
      %p18 = scmp.ge.s32.totalorder %s17, 4
      %s24 = sphi 0, %s36
      %s25 = sphi 0, %s32
      %s26 = sphi 0, %s24
      %s27 = sphi 0, %s25
      %s28 = sphi 0, %s26
      %s29 = sphi 0, %s27
      %s41 = sphi 0, %s43
      %s44 = sphi 0, %s41
      %s45 = sphi 0, %s44
      %s61 = sphi 0, %s45
      %s69 = sphi 0, %s71
      %s72 = sphi 0, %s69
      %s73 = sphi 0, %s72
      %s89 = sphi 0, %s73
      %s97 = sphi 0, %s99
      %s100 = sphi 0, %s97
      %s101 = sphi 0, %s100
      %s117 = sphi 0, %s101
    $region4: #{tpu_custom_call.1} parent=1 // loop_header_branch
      %20 = sbr.rel (%p18) target = $region8
    $region5: #{tpu_custom_call.1} parent=1 // loop_body
      %s22 = ssub.s32 %s17, 1
      %s23 = ssub.s32 %s17, 2
      %s30 = sadd.s32 1, %s25
      %p31 = scmp.ge.s32.totalorder %s30, 1
      %s32 = scalar_select %p31, 0, %s30
      %s33 = sadd.s32 1, %s24
      %s34 = scalar_select %p31, %s33, %s24
      %p35 = scmp.ge.s32.totalorder %s34, 2
      %s36 = scalar_select %p35, 0, %s34
      %s37 = ssub.s32 %s24, %s36
      %s38 = ssub.s32 %s25, %s32
      %s39 = sor.u32 %s37, %s38
      %p40 = scmp.eq.s32.totalorder %s39, 0
      %s42 = sadd.s32 %s41, 1
      %s43 = scalar_select %p40, %s41, %s42
      %p46 = pneg %p40
      %p47 = scmp.eq.s32.totalorder %s17, 1
      %p48 = por %p46, %p47
      %p49 = scmp.ne.s32.totalorder %s41, %s44
      %p50 = scmp.eq.s32.totalorder %s17, 0
      %p51 = por %p49, %p50
      %p52 = scmp.ne.s32.totalorder %s41, %s44
      %p53 = scmp.eq.s32.totalorder %s22, 1
      %p54 = por %p52, %p53
      %p55 = scmp.ne.s32.totalorder %s44, %s45
      %p56 = scmp.eq.s32.totalorder %s22, 0
      %p57 = por %p55, %p56
      %p58 = scmp.ne.s32.totalorder %s44, %s45
      %p59 = scmp.eq.s32.totalorder %s23, 1
      %p60 = por %p58, %p59
      %p62 = scmp.ne.s32.totalorder %s45, %s61
      %p63 = scmp.eq.s32.totalorder %s23, 0
      %p64 = por %p62, %p63
      %s65 = ssub.s32 %s24, %s36
      %s66 = ssub.s32 %s25, %s32
      %s67 = sor.u32 %s65, %s66
      %p68 = scmp.eq.s32.totalorder %s67, 0
      %s70 = sadd.s32 %s69, 1
      %s71 = scalar_select %p68, %s69, %s70
      %p74 = pneg %p68
      %p75 = scmp.eq.s32.totalorder %s17, 1
      %p76 = por %p74, %p75
      %p77 = scmp.ne.s32.totalorder %s69, %s72
      %p78 = scmp.eq.s32.totalorder %s17, 0
      %p79 = por %p77, %p78
      %p80 = scmp.ne.s32.totalorder %s69, %s72
      %p81 = scmp.eq.s32.totalorder %s22, 1
      %p82 = por %p80, %p81
      %p83 = scmp.ne.s32.totalorder %s72, %s73
      %p84 = scmp.eq.s32.totalorder %s22, 0
      %p85 = por %p83, %p84
      %p86 = scmp.ne.s32.totalorder %s72, %s73
      %p87 = scmp.eq.s32.totalorder %s23, 1
      %p88 = por %p86, %p87
      %p90 = scmp.ne.s32.totalorder %s73, %s89
      %p91 = scmp.eq.s32.totalorder %s23, 0
      %p92 = por %p90, %p91
      %s93 = ssub.s32 %s24, %s36
      %s94 = ssub.s32 %s25, %s32
      %s95 = sor.u32 %s93, %s94
      %p96 = scmp.eq.s32.totalorder %s95, 0
      %s98 = sadd.s32 %s97, 1
      %s99 = scalar_select %p96, %s97, %s98
      %p102 = pneg %p96
      %p103 = scmp.eq.s32.totalorder %s17, 1
      %p104 = por %p102, %p103
      %p105 = scmp.ne.s32.totalorder %s97, %s100
      %p106 = scmp.eq.s32.totalorder %s17, 0
      %p107 = por %p105, %p106
      %p108 = scmp.ne.s32.totalorder %s97, %s100
      %p109 = scmp.eq.s32.totalorder %s22, 1
      %p110 = por %p108, %p109
      %p111 = scmp.ne.s32.totalorder %s100, %s101
      %p112 = scmp.eq.s32.totalorder %s22, 0
      %p113 = por %p111, %p112
      %p114 = scmp.ne.s32.totalorder %s100, %s101
      %p115 = scmp.eq.s32.totalorder %s23, 1
      %p116 = por %p114, %p115
      %p118 = scmp.ne.s32.totalorder %s101, %s117
      %p119 = scmp.eq.s32.totalorder %s23, 0
      %p120 = por %p118, %p119
      %p121 = scmp.le.s32.totalorder 1, %s17
      %p122 = scmp.lt.s32.totalorder %s17, 3
      %p123 = pnand %p121, %p122
      %p124 = pneg %p123
      // Predicated region
      $region9: #{tpu_custom_call.1} parent=5 // pred_check
        _
      $region10: #{tpu_custom_call.1} parent=5 // pred_check_branch
        %126 = sbr.rel (%p123) target = $region12
      $region11: #{tpu_custom_call.1} parent=5 // pred_region
        %s127 = ssub.s32 %s17, 1
      $region12: #{tpu_custom_call.1} parent=5 // pred_fallthru
        _
      %p128 = scmp.lt.s32.totalorder %s17, 2
      // Predicated region
      $region13: #{tpu_custom_call.1} parent=5 // pred_check
        %p129 = pneg %p128
      $region14: #{tpu_custom_call.1} parent=5 // pred_check_branch
        %131 = sbr.rel (%p129) target = $region16
      $region15: #{tpu_custom_call.1} parent=5 // pred_region
        // Predicated region
        $region17: #{tpu_custom_call.1} parent=15 // pred_check
          %p132 = pneg %p51
        $region18: #{tpu_custom_call.1} parent=15 // pred_check_branch
          %134 = sbr.rel (%p132) target = $region20
        $region19: #{tpu_custom_call.1} parent=15 // pred_region
          %s135 = sand.u32 %s41, 1
          %s136 = scalar_lea.sflag [#allocation3], %s135
          %s137 = sand.u32 %s41, 1
          %s138 = smul.addr %s137, 384
          %s139 = scalar_lea.vmem [#allocation2], %s138
          %s140 = smul.u32 16, %s25
          %s142 = ssub.s32 6144, 6144
          %143 = vsyncadd %s136, %s142
          %s144 = smul.addr %s24, 48
          %s145 = sadd.s32 %s140, %s144
          %s146 = smul.addr %s145, 128
          %s147 = scalar_lea.hbm %s0, %s146
          %s148 = sshll.u32 %s139, 4
          %s149 = int_to_ptr.vmem [resolvable:$true] %s148
          %154 = dma.hbm_to_vmem [thread:$0]  %s147, 6144, %s149, %s136, 128, 128, 8
        $region20: #{tpu_custom_call.1} parent=15 // pred_fallthru
          _
        // Predicated region
        $region21: #{tpu_custom_call.1} parent=15 // pred_check
          %p155 = pneg %p79
        $region22: #{tpu_custom_call.1} parent=15 // pred_check_branch
          %157 = sbr.rel (%p155) target = $region24
        $region23: #{tpu_custom_call.1} parent=15 // pred_region
          #allocation9 [shape = 'u32[6]{0}', space=smem, size = 0x18, scoped, tag = 'DMA stride descriptor']
          %s158 = sand.u32 %s69, 1
          %s159 = scalar_lea.sflag [#allocation6], %s158
          %s160 = sand.u32 %s69, 1
          %s161 = smul.addr %s160, 384
          %s162 = scalar_lea.vmem [#allocation5], %s161
          %s163 = smul.u32 16, %s25
          %s165 = ssub.s32 6144, 6144
          %166 = vsyncadd %s159, %s165
          %s167 = smul.addr %s24, 16
          %s168 = sadd.s32 %s163, %s167
          %s169 = smul.addr %s168, 128
          %s170 = scalar_lea.hbm %s1, %s169
          %s172 = sshll.u32 1, 14
          %s173 = sxor.u32 4294967295, %s172
          %s175 = sld [smem:[#allocation0]]
          %s176 = sadd.s32 2, %s175
          %s178 = sshll.u32 7, 26
          %s179 = sxor.u32 4294967295, %s178
          %s180 = sand.u32 0, %s179
          %s181 = sshll.u32 %s176, 26
          %s182 = sor.u32 %s180, %s181
          %s183 = sshll.u32 %s162, 4
          %s184 = int_to_ptr.vmem [resolvable:$true] %s183
          %190 = sst [smem:[#allocation9]] 4096
          %s191 = scalar_lea.smem [#allocation9], 1
          %192 = sst [smem:[%s191]] 2048
          %s193 = scalar_lea.smem [#allocation9], 2
          %194 = sst [smem:[%s193]] 16
          %s195 = scalar_lea.smem [#allocation9], 3
          %196 = sst [smem:[%s195]] 128
          %s197 = scalar_lea.smem [#allocation9], 4
          %198 = sst [smem:[%s197]] 128
          %s199 = scalar_lea.smem [#allocation9], 5
          %200 = sst [smem:[%s199]] 8
          %202 = dma.general %s170, 6144, %s184, %s159, [#allocation8], [#allocation9], %s182, 0
        $region24: #{tpu_custom_call.1} parent=15 // pred_fallthru
          _
      $region16: #{tpu_custom_call.1} parent=5 // pred_fallthru
        _
      %p203 = scmp.le.s32.totalorder 1, %s17
      %p204 = scmp.lt.s32.totalorder %s17, 3
      %p205 = pnand %p203, %p204
      %p206 = pneg %p205
      // Predicated region
      $region25: #{tpu_custom_call.1} parent=5 // pred_check
        _
      $region26: #{tpu_custom_call.1} parent=5 // pred_check_branch
        %208 = sbr.rel (%p205) target = $region28
      $region27: #{tpu_custom_call.1} parent=5 // pred_region
        %s209 = ssub.s32 %s17, 1
        %s210 = sand.u32 %s44, 1
        %s211 = scalar_lea.sflag [#allocation3], %s210
        %s212 = sand.u32 %s44, 1
        %s213 = smul.addr %s212, 384
        %s214 = scalar_lea.vmem [#allocation2], %s213
        // Predicated region
        $region29: #{tpu_custom_call.1} parent=27 // pred_check
          %p215 = pneg %p57
        $region30: #{tpu_custom_call.1} parent=27 // pred_check_branch
          %217 = sbr.rel (%p215) target = $region32
        $region31: #{tpu_custom_call.1} parent=27 // pred_region
          %218 = dma.done %s211, 6144
        $region32: #{tpu_custom_call.1} parent=27 // pred_fallthru
          _
        %s219 = sand.u32 %s72, 1
        %s220 = scalar_lea.sflag [#allocation6], %s219
        %s221 = sand.u32 %s72, 1
        %s222 = smul.addr %s221, 384
        %s223 = scalar_lea.vmem [#allocation5], %s222
        // Predicated region
        $region33: #{tpu_custom_call.1} parent=27 // pred_check
          %p224 = pneg %p85
        $region34: #{tpu_custom_call.1} parent=27 // pred_check_branch
          %226 = sbr.rel (%p224) target = $region36
        $region35: #{tpu_custom_call.1} parent=27 // pred_region
          %227 = dma.done %s220, 6144
        $region36: #{tpu_custom_call.1} parent=27 // pred_fallthru
          _
        %s228 = sand.u32 %s44, 1
        %s229 = scalar_lea.sflag [#allocation3], %s228
        %s230 = sand.u32 %s44, 1
        %s231 = smul.addr %s230, 384
        %s232 = scalar_lea.vmem [#allocation2], %s231
        %p233 = pneg %p57
        %p234 = pneg %p54
        %s235 = sand.u32 %s72, 1
        %s236 = scalar_lea.sflag [#allocation6], %s235
        %s237 = sand.u32 %s72, 1
        %s238 = smul.addr %s237, 384
        %s239 = scalar_lea.vmem [#allocation5], %s238
        %p240 = pneg %p85
        %p241 = pneg %p82
        %p242 = pneg %p113
        %p243 = pneg %p110
        %s244 = sand.u32 %s100, 1
        %s245 = scalar_lea.sflag [#allocation4], %s244
        %s246 = sand.u32 %s100, 1
        %s247 = smul.addr %s246, 384
        %s248 = scalar_lea.vmem [#allocation7], %s247
        %s249 = smul.u32 16, %s27
        %s250 = smul.u32 16, %s27
        %s251 = smul.u32 16, %s27
        %v252 = vld [vmem:[%s214] sm:$0xff]
        %v253 = vld [vmem:[%s214 + $0x8] sm:$0xff]
        %v254 = vld [vmem:[%s214 + $0x10] sm:$0xff]
        %v255 = vld [vmem:[%s214 + $0x18] sm:$0xff]
        %v256 = vld [vmem:[%s214 + $0x20] sm:$0xff]
        %v257 = vld [vmem:[%s214 + $0x28] sm:$0xff]
        %v258 = vld [vmem:[%s214 + $0x30] sm:$0xff]
        %v259 = vld [vmem:[%s214 + $0x38] sm:$0xff]
        %v260 = vld [vmem:[%s214 + $0x40] sm:$0xff]
        %v261 = vld [vmem:[%s214 + $0x48] sm:$0xff]
        %v262 = vld [vmem:[%s214 + $0x50] sm:$0xff]
        %v263 = vld [vmem:[%s214 + $0x58] sm:$0xff]
        %v264 = vld [vmem:[%s214 + $0x60] sm:$0xff]
        %v265 = vld [vmem:[%s214 + $0x68] sm:$0xff]
        %v266 = vld [vmem:[%s214 + $0x70] sm:$0xff]
        %v267 = vld [vmem:[%s214 + $0x78] sm:$0xff]
        %v268 = vld [vmem:[%s214 + $0x80] sm:$0xff]
        %v269 = vld [vmem:[%s214 + $0x88] sm:$0xff]
        %v270 = vld [vmem:[%s214 + $0x90] sm:$0xff]
        %v271 = vld [vmem:[%s214 + $0x98] sm:$0xff]
        %v272 = vld [vmem:[%s214 + $0xa0] sm:$0xff]
        %v273 = vld [vmem:[%s214 + $0xa8] sm:$0xff]
        %v274 = vld [vmem:[%s214 + $0xb0] sm:$0xff]
        %v275 = vld [vmem:[%s214 + $0xb8] sm:$0xff]
        %v276 = vld [vmem:[%s214 + $0xc0] sm:$0xff]
        %v277 = vld [vmem:[%s214 + $0xc8] sm:$0xff]
        %v278 = vld [vmem:[%s214 + $0xd0] sm:$0xff]
        %v279 = vld [vmem:[%s214 + $0xd8] sm:$0xff]
        %v280 = vld [vmem:[%s214 + $0xe0] sm:$0xff]
        %v281 = vld [vmem:[%s214 + $0xe8] sm:$0xff]
        %v282 = vld [vmem:[%s214 + $0xf0] sm:$0xff]
        %v283 = vld [vmem:[%s214 + $0xf8] sm:$0xff]
        %v284 = vld [vmem:[%s214 + $0x100] sm:$0xff]
        %v285 = vld [vmem:[%s214 + $0x108] sm:$0xff]
        %v286 = vld [vmem:[%s214 + $0x110] sm:$0xff]
        %v287 = vld [vmem:[%s214 + $0x118] sm:$0xff]
        %v288 = vld [vmem:[%s214 + $0x120] sm:$0xff]
        %v289 = vld [vmem:[%s214 + $0x128] sm:$0xff]
        %v290 = vld [vmem:[%s214 + $0x130] sm:$0xff]
        %v291 = vld [vmem:[%s214 + $0x138] sm:$0xff]
        %v292 = vld [vmem:[%s214 + $0x140] sm:$0xff]
        %v293 = vld [vmem:[%s214 + $0x148] sm:$0xff]
        %v294 = vld [vmem:[%s214 + $0x150] sm:$0xff]
        %v295 = vld [vmem:[%s214 + $0x158] sm:$0xff]
        %v296 = vld [vmem:[%s214 + $0x160] sm:$0xff]
        %v297 = vld [vmem:[%s214 + $0x168] sm:$0xff]
        %v298 = vld [vmem:[%s214 + $0x170] sm:$0xff]
        %v299 = vld [vmem:[%s214 + $0x178] sm:$0xff]
        %v300 = vld [vmem:[%s223] sm:$0xff]
        %v301 = vld [vmem:[%s223 + $0x8] sm:$0xff]
        %v302 = vld [vmem:[%s223 + $0x10] sm:$0xff]
        %v303 = vld [vmem:[%s223 + $0x18] sm:$0xff]
        %v304 = vld [vmem:[%s223 + $0x20] sm:$0xff]
        %v305 = vld [vmem:[%s223 + $0x28] sm:$0xff]
        %v306 = vld [vmem:[%s223 + $0x30] sm:$0xff]
        %v307 = vld [vmem:[%s223 + $0x38] sm:$0xff]
        %v308 = vld [vmem:[%s223 + $0x40] sm:$0xff]
        %v309 = vld [vmem:[%s223 + $0x48] sm:$0xff]
        %v310 = vld [vmem:[%s223 + $0x50] sm:$0xff]
        %v311 = vld [vmem:[%s223 + $0x58] sm:$0xff]
        %v312 = vld [vmem:[%s223 + $0x60] sm:$0xff]
        %v313 = vld [vmem:[%s223 + $0x68] sm:$0xff]
        %v314 = vld [vmem:[%s223 + $0x70] sm:$0xff]
        %v315 = vld [vmem:[%s223 + $0x78] sm:$0xff]
        %v316 = vld [vmem:[%s223 + $0x80] sm:$0xff]
        %v317 = vld [vmem:[%s223 + $0x88] sm:$0xff]
        %v318 = vld [vmem:[%s223 + $0x90] sm:$0xff]
        %v319 = vld [vmem:[%s223 + $0x98] sm:$0xff]
        %v320 = vld [vmem:[%s223 + $0xa0] sm:$0xff]
        %v321 = vld [vmem:[%s223 + $0xa8] sm:$0xff]
        %v322 = vld [vmem:[%s223 + $0xb0] sm:$0xff]
        %v323 = vld [vmem:[%s223 + $0xb8] sm:$0xff]
        %v324 = vld [vmem:[%s223 + $0xc0] sm:$0xff]
        %v325 = vld [vmem:[%s223 + $0xc8] sm:$0xff]
        %v326 = vld [vmem:[%s223 + $0xd0] sm:$0xff]
        %v327 = vld [vmem:[%s223 + $0xd8] sm:$0xff]
        %v328 = vld [vmem:[%s223 + $0xe0] sm:$0xff]
        %v329 = vld [vmem:[%s223 + $0xe8] sm:$0xff]
        %v330 = vld [vmem:[%s223 + $0xf0] sm:$0xff]
        %v331 = vld [vmem:[%s223 + $0xf8] sm:$0xff]
        %v332 = vld [vmem:[%s223 + $0x100] sm:$0xff]
        %v333 = vld [vmem:[%s223 + $0x108] sm:$0xff]
        %v334 = vld [vmem:[%s223 + $0x110] sm:$0xff]
        %v335 = vld [vmem:[%s223 + $0x118] sm:$0xff]
        %v336 = vld [vmem:[%s223 + $0x120] sm:$0xff]
        %v337 = vld [vmem:[%s223 + $0x128] sm:$0xff]
        %v338 = vld [vmem:[%s223 + $0x130] sm:$0xff]
        %v339 = vld [vmem:[%s223 + $0x138] sm:$0xff]
        %v340 = vld [vmem:[%s223 + $0x140] sm:$0xff]
        %v341 = vld [vmem:[%s223 + $0x148] sm:$0xff]
        %v342 = vld [vmem:[%s223 + $0x150] sm:$0xff]
        %v343 = vld [vmem:[%s223 + $0x158] sm:$0xff]
        %v344 = vld [vmem:[%s223 + $0x160] sm:$0xff]
        %v345 = vld [vmem:[%s223 + $0x168] sm:$0xff]
        %v346 = vld [vmem:[%s223 + $0x170] sm:$0xff]
        %v347 = vld [vmem:[%s223 + $0x178] sm:$0xff]
        %v348 = vmul.f32 %v252, %v300
        %v349 = vmul.f32 %v253, %v301
        %v350 = vmul.f32 %v254, %v302
        %v351 = vmul.f32 %v255, %v303
        %v352 = vmul.f32 %v256, %v304
        %v353 = vmul.f32 %v257, %v305
        %v354 = vmul.f32 %v258, %v306
        %v355 = vmul.f32 %v259, %v307
        %v356 = vmul.f32 %v260, %v308
        %v357 = vmul.f32 %v261, %v309
        %v358 = vmul.f32 %v262, %v310
        %v359 = vmul.f32 %v263, %v311
        %v360 = vmul.f32 %v264, %v312
        %v361 = vmul.f32 %v265, %v313
        %v362 = vmul.f32 %v266, %v314
        %v363 = vmul.f32 %v267, %v315
        %v364 = vmul.f32 %v268, %v316
        %v365 = vmul.f32 %v269, %v317
        %v366 = vmul.f32 %v270, %v318
        %v367 = vmul.f32 %v271, %v319
        %v368 = vmul.f32 %v272, %v320
        %v369 = vmul.f32 %v273, %v321
        %v370 = vmul.f32 %v274, %v322
        %v371 = vmul.f32 %v275, %v323
        %v372 = vmul.f32 %v276, %v324
        %v373 = vmul.f32 %v277, %v325
        %v374 = vmul.f32 %v278, %v326
        %v375 = vmul.f32 %v279, %v327
        %v376 = vmul.f32 %v280, %v328
        %v377 = vmul.f32 %v281, %v329
        %v378 = vmul.f32 %v282, %v330
        %v379 = vmul.f32 %v283, %v331
        %v380 = vmul.f32 %v284, %v332
        %v381 = vmul.f32 %v285, %v333
        %v382 = vmul.f32 %v286, %v334
        %v383 = vmul.f32 %v287, %v335
        %v384 = vmul.f32 %v288, %v336
        %v385 = vmul.f32 %v289, %v337
        %v386 = vmul.f32 %v290, %v338
        %v387 = vmul.f32 %v291, %v339
        %v388 = vmul.f32 %v292, %v340
        %v389 = vmul.f32 %v293, %v341
        %v390 = vmul.f32 %v294, %v342
        %v391 = vmul.f32 %v295, %v343
        %v392 = vmul.f32 %v296, %v344
        %v393 = vmul.f32 %v297, %v345
        %v394 = vmul.f32 %v298, %v346
        %v395 = vmul.f32 %v299, %v347
        %396 = vst [vmem:[%s248] sm:$0xff] %v348
        %397 = vst [vmem:[%s248 + $0x8] sm:$0xff] %v349
        %398 = vst [vmem:[%s248 + $0x10] sm:$0xff] %v350
        %399 = vst [vmem:[%s248 + $0x18] sm:$0xff] %v351
        %400 = vst [vmem:[%s248 + $0x20] sm:$0xff] %v352
        %401 = vst [vmem:[%s248 + $0x28] sm:$0xff] %v353
        %402 = vst [vmem:[%s248 + $0x30] sm:$0xff] %v354
        %403 = vst [vmem:[%s248 + $0x38] sm:$0xff] %v355
        %404 = vst [vmem:[%s248 + $0x40] sm:$0xff] %v356
        %405 = vst [vmem:[%s248 + $0x48] sm:$0xff] %v357
        %406 = vst [vmem:[%s248 + $0x50] sm:$0xff] %v358
        %407 = vst [vmem:[%s248 + $0x58] sm:$0xff] %v359
        %408 = vst [vmem:[%s248 + $0x60] sm:$0xff] %v360
        %409 = vst [vmem:[%s248 + $0x68] sm:$0xff] %v361
        %410 = vst [vmem:[%s248 + $0x70] sm:$0xff] %v362
        %411 = vst [vmem:[%s248 + $0x78] sm:$0xff] %v363
        %412 = vst [vmem:[%s248 + $0x80] sm:$0xff] %v364
        %413 = vst [vmem:[%s248 + $0x88] sm:$0xff] %v365
        %414 = vst [vmem:[%s248 + $0x90] sm:$0xff] %v366
        %415 = vst [vmem:[%s248 + $0x98] sm:$0xff] %v367
        %416 = vst [vmem:[%s248 + $0xa0] sm:$0xff] %v368
        %417 = vst [vmem:[%s248 + $0xa8] sm:$0xff] %v369
        %418 = vst [vmem:[%s248 + $0xb0] sm:$0xff] %v370
        %419 = vst [vmem:[%s248 + $0xb8] sm:$0xff] %v371
        %420 = vst [vmem:[%s248 + $0xc0] sm:$0xff] %v372
        %421 = vst [vmem:[%s248 + $0xc8] sm:$0xff] %v373
        %422 = vst [vmem:[%s248 + $0xd0] sm:$0xff] %v374
        %423 = vst [vmem:[%s248 + $0xd8] sm:$0xff] %v375
        %424 = vst [vmem:[%s248 + $0xe0] sm:$0xff] %v376
        %425 = vst [vmem:[%s248 + $0xe8] sm:$0xff] %v377
        %426 = vst [vmem:[%s248 + $0xf0] sm:$0xff] %v378
        %427 = vst [vmem:[%s248 + $0xf8] sm:$0xff] %v379
        %428 = vst [vmem:[%s248 + $0x100] sm:$0xff] %v380
        %429 = vst [vmem:[%s248 + $0x108] sm:$0xff] %v381
        %430 = vst [vmem:[%s248 + $0x110] sm:$0xff] %v382
        %431 = vst [vmem:[%s248 + $0x118] sm:$0xff] %v383
        %432 = vst [vmem:[%s248 + $0x120] sm:$0xff] %v384
        %433 = vst [vmem:[%s248 + $0x128] sm:$0xff] %v385
        %434 = vst [vmem:[%s248 + $0x130] sm:$0xff] %v386
        %435 = vst [vmem:[%s248 + $0x138] sm:$0xff] %v387
        %436 = vst [vmem:[%s248 + $0x140] sm:$0xff] %v388
        %437 = vst [vmem:[%s248 + $0x148] sm:$0xff] %v389
        %438 = vst [vmem:[%s248 + $0x150] sm:$0xff] %v390
        %439 = vst [vmem:[%s248 + $0x158] sm:$0xff] %v391
        %440 = vst [vmem:[%s248 + $0x160] sm:$0xff] %v392
        %441 = vst [vmem:[%s248 + $0x168] sm:$0xff] %v393
        %442 = vst [vmem:[%s248 + $0x170] sm:$0xff] %v394
        %443 = vst [vmem:[%s248 + $0x178] sm:$0xff] %v395
        %s444 = sand.u32 %s100, 1
        %s445 = scalar_lea.sflag [#allocation4], %s444
        %s446 = sand.u32 %s100, 1
        %s447 = smul.addr %s446, 384
        %s448 = scalar_lea.vmem [#allocation7], %s447
        // Predicated region
        $region37: #{tpu_custom_call.1} parent=27 // pred_check
          %p449 = pneg %p110
        $region38: #{tpu_custom_call.1} parent=27 // pred_check_branch
          %451 = sbr.rel (%p449) target = $region40
        $region39: #{tpu_custom_call.1} parent=27 // pred_region
          %s452 = smul.u32 16, %s27
          %s454 = ssub.s32 6144, 6144
          %455 = vsyncadd %s445, %s454
          %s456 = smul.addr %s26, 48
          %s457 = sadd.s32 %s452, %s456
          %s458 = smul.addr %s457, 128
          %s459 = scalar_lea.hbm %s2, %s458
          %s460 = sshll.u32 %s448, 4
          %s461 = int_to_ptr.vmem [resolvable:$true] %s460
          %466 = dma.vmem_to_hbm [thread:$0]  %s461, 6144, %s459, %s445, 128, 128, 8
        $region40: #{tpu_custom_call.1} parent=27 // pred_fallthru
          _
      $region28: #{tpu_custom_call.1} parent=5 // pred_fallthru
        _
      %p467 = scmp.le.s32.totalorder 2, %s17
      // Predicated region
      $region41: #{tpu_custom_call.1} parent=5 // pred_check
        %p468 = pneg %p467
      $region42: #{tpu_custom_call.1} parent=5 // pred_check_branch
        %470 = sbr.rel (%p468) target = $region44
      $region43: #{tpu_custom_call.1} parent=5 // pred_region
        %s471 = ssub.s32 %s17, 2
        // Predicated region
        $region45: #{tpu_custom_call.1} parent=43 // pred_check
          %p472 = pneg %p116
        $region46: #{tpu_custom_call.1} parent=43 // pred_check_branch
          %474 = sbr.rel (%p472) target = $region48
        $region47: #{tpu_custom_call.1} parent=43 // pred_region
          %s475 = sand.u32 %s101, 1
          %s476 = scalar_lea.sflag [#allocation4], %s475
          %s477 = sand.u32 %s101, 1
          %s478 = smul.addr %s477, 384
          %s479 = scalar_lea.vmem [#allocation7], %s478
          %480 = dma.done %s476, 6144
        $region48: #{tpu_custom_call.1} parent=43 // pred_fallthru
          _
      $region44: #{tpu_custom_call.1} parent=5 // pred_fallthru
        _
    $region6: #{tpu_custom_call.1} parent=1 // loop_footer
      %s21 = sadd.s32 1, %s17
    $region7: #{tpu_custom_call.1} parent=1 // loop_footer_branch
      %16 = sbr.rel target = $region3
    $region8: #{tpu_custom_call.1} parent=1 // loop_exit
      _
    %481 = vsyncpa [#allocation3], 1
    %s482 = scalar_lea.sflag [#allocation3], 1
    %483 = vsyncpa %s482, 1
    %484 = vsyncpa [#allocation6], 1
    %s485 = scalar_lea.sflag [#allocation6], 1
    %486 = vsyncpa %s485, 1
    %487 = vsyncpa [#allocation4], 1
    %s488 = scalar_lea.sflag [#allocation4], 1
    %489 = vsyncpa %s488, 1

</llo_original>
